<compile_context>
chip_gen: v5e
topology: v5e:2x2
jax: 0.10.0
libtpu: 0.0.40
codegen_flags: <defaults>
</compile_context>

<pallas_src>
import functools

import jax
import jax.numpy as jnp
from jax.experimental import pallas as pl
from jax.experimental.pallas import tpu as pltpu


def _tile_n(n, max_tile=512):
    # Whole batch if it fits, else 512-row tiles (multiple of 8 sublanes).
    # 512 x 256 f32, double-buffered, stays far below the 32 MiB scoped VMEM
    # default on every generation (including v7x's 64 MiB part).
    return n if n <= max_tile else max_tile


# ---------------------------------------------------------------------------
# propagate=True branch
#   out[n, j] = sum_{k,i} u[n,k] * x[n,i] * W[j, k*b + i]        (W: (b, ud*b))
# ---------------------------------------------------------------------------
def _propagate_kernel(x_ref, u_ref, e_ref, wt_ref, o_ref, *, mm_dtype):
    x = x_ref[...].astype(jnp.float32)                       # (tn, b)
    u = u_ref[...].astype(jnp.float32)                       # (tn, ud)
    ud = u.shape[1]
    # u_expanded[n, k*b+i] = u[n, k]   (tiny K=ud MXU matmul, no reshapes)
    u_exp = jnp.dot(u, e_ref[...], preferred_element_type=jnp.float32)
    # x_tiled[n, k*b+i] = x[n, i]      (lane-axis concat of static copies)
    x_til = jnp.concatenate([x] * ud, axis=1)
    kron = u_exp * x_til                                      # (tn, ud*b)
    # single fused K=ud*b matmul against the pre-transposed weight
    o_ref[...] = jnp.dot(kron.astype(mm_dtype), wt_ref[...].astype(mm_dtype),
                         preferred_element_type=jnp.float32).astype(o_ref.dtype)


def u_dynamics_propagate(x, u, w_ud, *, mm_dtype=jnp.float32, max_tile=512):
    n, b = x.shape
    ud = u.shape[1]
    tn = _tile_n(n, max_tile)
    wt = w_ud.T                                               # (ud*b, b): transposed once, outside the kernel
    # E[k, k*b + i] = 1 : expansion matrix for the element-repeat of u
    e = jnp.repeat(jnp.eye(ud, dtype=jnp.float32), b, axis=1)  # (ud, ud*b)
    kernel = functools.partial(_propagate_kernel, mm_dtype=mm_dtype)
    return pl.pallas_call(
        kernel,
        out_shape=jax.ShapeDtypeStruct((n, b), x.dtype),
        grid=(pl.cdiv(n, tn),),
        in_specs=[
            pl.BlockSpec((tn, b), lambda i: (i, 0)),          # x    (batch-tiled)
            pl.BlockSpec((tn, ud), lambda i: (i, 0)),         # u    (batch-tiled)
            pl.BlockSpec((ud, ud * b), lambda i: (0, 0)),     # E    (resident)
            pl.BlockSpec((ud * b, b), lambda i: (0, 0)),      # W.T  (resident)
        ],
        out_specs=pl.BlockSpec((tn, b), lambda i: (i, 0)),
        compiler_params=pltpu.CompilerParams(
            dimension_semantics=("parallel",)),
    )(x, u, e, wt)


# ---------------------------------------------------------------------------
# propagate=False branch
# ---------------------------------------------------------------------------
def _mapping_kernel(x_ref, w1t_ref, b1_ref, w2t_ref, b2_ref,
                    gn_ref, lg_ref, o_ref, *, add_noise, mm_dtype):
    x = x_ref[...].astype(mm_dtype)                           # (tn, s)
    # nn.Linear(s, 2s) with pre-transposed weight (no in-kernel .T)
    h = jnp.dot(x, w1t_ref[...].astype(mm_dtype),
                preferred_element_type=jnp.float32) + b1_ref[...]
    # CELU(alpha=1); elementwise math kept in f32 (v5e VPU/EUP have no bf16)
    h = jnp.where(h > 0, h, jnp.expm1(h))
    # nn.Linear(2s, ud) -> logits
    logit = jnp.dot(h.astype(mm_dtype), w2t_ref[...].astype(mm_dtype),
                    preferred_element_type=jnp.float32) + b2_ref[...]
    if add_noise:                                             # noise=True and count < 8000
        logit = logit + gn_ref[...] * 0.1
    # NumericalRelaxedBernoulli(logits, temp).rsample(): u_y = (logit + L)/temp,
    # L ~ Logistic(0,1).  round(sigmoid(u_y / temp)) == (logit + L > 0) for any
    # temp > 0, so the temperature drops out of the hard sample.
    u_hard = (logit + lg_ref[...] > 0.0).astype(jnp.float32)
    # fused lane-contiguous output slab: [u | logit]
    o_ref[...] = jnp.concatenate([u_hard, logit], axis=1).astype(o_ref.dtype)


def u_dynamics_mapping(x, params, key, *, temp=1.0, noise=True,
                       mm_dtype=jnp.float32, max_tile=512):
    # `temp` is accepted for API parity with the PyTorch module; the hard
    # 0/1 sample is provably invariant to temp > 0 (see kernel comment).
    del temp
    n, s = x.shape
    w1, b1, w2, b2 = params
    ud = w2.shape[0]
    tn = _tile_n(n, max_tile)
    # pre-transpose once outside the kernel
    w1t = w1.T                                                # (s, 2s)
    w2t = w2.T                                                # (2s, ud)
    kg, kl = jax.random.split(key)
    gnoise = jax.random.normal(kg, (n, ud), jnp.float32)
    # logistic noise == log(U) - log1p(-U) of the torch rsample, precomputed so
    # the kernel carries no log/log1p EUP work.
    logistic = jax.random.logistic(kl, (n, ud), jnp.float32)
    kernel = functools.partial(_mapping_kernel, add_noise=bool(noise),
                               mm_dtype=mm_dtype)
    fused = pl.pallas_call(
        kernel,
        out_shape=jax.ShapeDtypeStruct((n, 2 * ud), x.dtype),
        grid=(pl.cdiv(n, tn),),
        in_specs=[
            pl.BlockSpec((tn, s), lambda i: (i, 0)),          # x        (batch-tiled)
            pl.BlockSpec((s, 2 * s), lambda i: (0, 0)),       # W1.T     (resident)
            pl.BlockSpec((1, 2 * s), lambda i: (0, 0)),       # b1
            pl.BlockSpec((2 * s, ud), lambda i: (0, 0)),      # W2.T     (resident)
            pl.BlockSpec((1, ud), lambda i: (0, 0)),          # b2
            pl.BlockSpec((tn, ud), lambda i: (i, 0)),         # gaussian (batch-tiled)
            pl.BlockSpec((tn, ud), lambda i: (i, 0)),         # logistic (batch-tiled)
        ],
        out_specs=pl.BlockSpec((tn, 2 * ud), lambda i: (i, 0)),
        compiler_params=pltpu.CompilerParams(
            dimension_semantics=("parallel",)),
    )(x, w1t, b1.reshape(1, -1), w2t, b2.reshape(1, -1), gnoise, logistic)
    return fused[:, :ud], fused[:, ud:]


if __name__ == "__main__":
    # module hyper-params: u_dynamics(b, s, ud)
    b, s, ud = 32, 16, 8
    N = 8  # batch

    key = jax.random.PRNGKey(0)
    k1, k2, k3, k4, k5, k6, k7 = jax.random.split(key, 7)

    # -------- deterministic parameter init (shapes from __init__) ----------
    # self.u_dynamics = nn.Linear(ud*b, b, bias=False); weight filled with 0.001
    w_ud = jnp.full((b, ud * b), 0.001, dtype=jnp.float32)
    # nlinear_u_mapping[0] = nn.Linear(s, 2s)
    bound1 = 1.0 / (s ** 0.5)
    w1 = jax.random.uniform(k1, (2 * s, s), jnp.float32, -bound1, bound1)
    b1 = jax.random.uniform(k2, (2 * s,), jnp.float32, -bound1, bound1)
    # linear_u_mapping = nn.Linear(2s, ud)
    bound2 = 1.0 / ((2 * s) ** 0.5)
    w2 = jax.random.uniform(k3, (ud, 2 * s), jnp.float32, -bound2, bound2)
    b2 = jax.random.uniform(k4, (ud,), jnp.float32, -bound2, bound2)

    # -------------------- propagate=True path ------------------------------
    x = jax.random.normal(k5, (N, b), jnp.float32)
    u = jax.random.normal(k6, (N, ud), jnp.float32)
    out = u_dynamics_propagate(x, u, w_ud)
    jax.block_until_ready(out)

    # plain-JAX reference of the propagate branch
    ref = (u[:, :, None] * x[:, None, :]).reshape(N, -1) @ w_ud.T
    assert jnp.allclose(out, ref, atol=1e-5, rtol=1e-5), "propagate mismatch"

    # -------------------- propagate=False path -----------------------------
    xs = jax.random.normal(k7, (N, s), jnp.float32)
    map_key = jax.random.PRNGKey(1)
    u_hard, u_logit = u_dynamics_mapping(
        xs, (w1, b1, w2, b2), map_key, temp=1.0, noise=True)
    jax.block_until_ready((u_hard, u_logit))
    assert u_hard.shape == (N, ud) and u_logit.shape == (N, ud)
    # hard samples are exactly 0/1
    assert bool(jnp.all((u_hard == 0.0) | (u_hard == 1.0)))

    # plain-JAX reference with the same noise draws
    kg, kl = jax.random.split(map_key)
    gn = jax.random.normal(kg, (N, ud), jnp.float32)
    lg = jax.random.logistic(kl, (N, ud), jnp.float32)
    h_ref = xs @ w1.T + b1
    h_ref = jnp.where(h_ref > 0, h_ref, jnp.expm1(h_ref))
    logit_ref = h_ref @ w2.T + b2 + gn * 0.1
    u_ref = (logit_ref + lg > 0).astype(jnp.float32)
    assert jnp.allclose(u_logit, logit_ref, atol=1e-5, rtol=1e-5), "logit mismatch"
    assert bool(jnp.all(u_hard == u_ref)), "hard sample mismatch"

    print("KERNEL_OK")
</pallas_src>

<mosaic_0001>
module attributes {stable_mosaic.version = 11 : i64} {
  func.func @_propagate_kernel(%arg0: i32, %arg1: memref<8x32xf32, #tpu.memory_space<vmem>>, %arg2: memref<8x8xf32, #tpu.memory_space<vmem>>, %arg3: memref<8x256xf32, #tpu.memory_space<vmem>>, %arg4: memref<256x32xf32, #tpu.memory_space<vmem>>, %arg5: memref<8x32xf32, #tpu.memory_space<vmem>>) attributes {dimension_semantics = [#tpu.dimension_semantics<parallel>], iteration_bounds = array<i64: 1>, scalar_prefetch = 0 : i64, scratch_operands = 0 : i64, tpu.core_type = #tpu.core_type<tc>, window_params = [{transform_indices = @transform_0, window_bounds = array<i64: 8, 32>}, {transform_indices = @transform_1, window_bounds = array<i64: 8, 8>}, {pipeline_mode = #tpu.pipeline_mode<synchronous>, transform_indices = @transform_2, window_bounds = array<i64: 8, 256>}, {pipeline_mode = #tpu.pipeline_mode<synchronous>, transform_indices = @transform_3, window_bounds = array<i64: 256, 32>}, {transform_indices = @transform_4, window_bounds = array<i64: 8, 32>}]} {
    %c0 = arith.constant 0 : index
    %c0_0 = arith.constant 0 : index
    %0 = vector.load %arg1[%c0, %c0_0] : memref<8x32xf32, #tpu.memory_space<vmem>>, vector<8x32xf32>
    %c0_1 = arith.constant 0 : index
    %c0_2 = arith.constant 0 : index
    %1 = vector.load %arg2[%c0_1, %c0_2] : memref<8x8xf32, #tpu.memory_space<vmem>>, vector<8x8xf32>
    %c0_3 = arith.constant 0 : index
    %c0_4 = arith.constant 0 : index
    %2 = vector.load %arg3[%c0_3, %c0_4] : memref<8x256xf32, #tpu.memory_space<vmem>>, vector<8x256xf32>
    %cst = arith.constant dense<0.000000e+00> : vector<8x256xf32>
    %3 = tpu.matmul %1, %2, %cst {dimension_numbers = #tpu.dot_dimension_numbers<[1], [0], [0], [1], [0, 0, 1, 1], [], []>} : vector<8x8xf32>, vector<8x256xf32>, vector<8x256xf32> -> vector<8x256xf32>
    %4 = tpu.concatenate %0, %0, %0, %0, %0, %0, %0, %0 in 1 : vector<8x32xf32>, vector<8x32xf32>, vector<8x32xf32>, vector<8x32xf32>, vector<8x32xf32>, vector<8x32xf32>, vector<8x32xf32>, vector<8x32xf32> -> vector<8x256xf32>
    %5 = arith.mulf %3, %4 : vector<8x256xf32>
    %c0_5 = arith.constant 0 : index
    %c0_6 = arith.constant 0 : index
    %6 = vector.load %arg4[%c0_5, %c0_6] : memref<256x32xf32, #tpu.memory_space<vmem>>, vector<256x32xf32>
    %cst_7 = arith.constant dense<0.000000e+00> : vector<8x32xf32>
    %7 = tpu.matmul %5, %6, %cst_7 {dimension_numbers = #tpu.dot_dimension_numbers<[1], [0], [0], [1], [0, 0, 1, 1], [], []>} : vector<8x256xf32>, vector<256x32xf32>, vector<8x32xf32> -> vector<8x32xf32>
    %c0_8 = arith.constant 0 : index
    %c0_9 = arith.constant 0 : index
    %8 = vector.load %arg5[%c0_8, %c0_9] : memref<8x32xf32, #tpu.memory_space<vmem>>, vector<8x32xf32>
    tpu.vector_store %arg5[%c0_8, %c0_9], %7 {strides = array<i32>} : memref<8x32xf32, #tpu.memory_space<vmem>>, vector<8x32xf32>,
    return
  }
  func.func @transform_0(%arg0: i32) -> (i32, i32) {
    %c0_i32 = arith.constant 0 : i32
    %c0_i32_0 = arith.constant 0 : i32
    return %arg0, %c0_i32 : i32, i32
  }
  func.func @transform_1(%arg0: i32) -> (i32, i32) {
    %c0_i32 = arith.constant 0 : i32
    %c0_i32_0 = arith.constant 0 : i32
    return %arg0, %c0_i32 : i32, i32
  }
  func.func @transform_2(%arg0: i32) -> (i32, i32) {
    %c0_i32 = arith.constant 0 : i32
    %c0_i32_0 = arith.constant 0 : i32
    %c0_i32_1 = arith.constant 0 : i32
    return %c0_i32, %c0_i32_0 : i32, i32
  }
  func.func @transform_3(%arg0: i32) -> (i32, i32) {
    %c0_i32 = arith.constant 0 : i32
    %c0_i32_0 = arith.constant 0 : i32
    %c0_i32_1 = arith.constant 0 : i32
    return %c0_i32, %c0_i32_0 : i32, i32
  }
  func.func @transform_4(%arg0: i32) -> (i32, i32) {
    %c0_i32 = arith.constant 0 : i32
    %c0_i32_0 = arith.constant 0 : i32
    return %arg0, %c0_i32 : i32, i32
  }
}

</mosaic_0001>

<llo_original>
// kernel: tpu_custom_call.1
$region0: #{tpu_custom_call.1}
  #allocation0 [shape = 'u32[]', space=smem, size = 0x4, offset = 0x4, fixed_abs, tag = 'smem constant byte address 0x4 - core index']
  #allocation1 [shape = 'u32[72,128]{1,0:T(1,128)}', space=vmem, size = 0x9000, scoped, tag = 'internal scratch']
  %s0 = inlined_call_operand.vmem [shape: f32[8,32], index: 0, kind: input, shape index: {}]
  %s1 = inlined_call_operand.vmem [shape: f32[8,8], index: 1, kind: input, shape index: {}]
  %s2 = inlined_call_operand.vmem [shape: f32[8,256], index: 2, kind: input, shape index: {}]
  %s3 = inlined_call_operand.vmem [shape: f32[256,32], index: 3, kind: input, shape index: {}]
  %s4 = inlined_call_operand.hbm [shape: f32[8,32], index: 4, kind: output, shape index: {}]
  %s5 = sld [smem:[#allocation0]]
  $region26: #{tpu_custom_call.1} parent=0
    _
  %s7 = ssub.s32 1, %s5
  %s8 = scalar_select 0, %s7, %s5
  $region1: #{tpu_custom_call.1} parent=0
    #allocation2 [shape = 'u8[4096]{0}', space=vmem, size = 0x1000, scoped, tag = 'output window, operand 0, single buffered']
    #allocation3 [shape = 's32[1]{0}', space=sflag, size = 0x4, scoped, tag = 'scoped memory for tpu_custom_call.1']
    %9 = vsyncpa [#allocation3], 0
    // Predicated region
    $region2: #{tpu_custom_call.1} parent=1 // pred_check
      _
    $region3: #{tpu_custom_call.1} parent=1 // pred_check_branch
      %11 = sbr.rel (0) target = $region5
    $region4: #{tpu_custom_call.1} parent=1 // pred_region
      _
    $region5: #{tpu_custom_call.1} parent=1 // pred_fallthru
      _
    // Predicated region
    $region6: #{tpu_custom_call.1} parent=1 // pred_check
      _
    $region7: #{tpu_custom_call.1} parent=1 // pred_check_branch
      %13 = sbr.rel (0) target = $region9
    $region8: #{tpu_custom_call.1} parent=1 // pred_region
      _
    $region9: #{tpu_custom_call.1} parent=1 // pred_fallthru
      _
    // Predicated region
    $region10: #{tpu_custom_call.1} parent=1 // pred_check
      _
    $region11: #{tpu_custom_call.1} parent=1 // pred_check_branch
      %15 = sbr.rel (0) target = $region13
    $region12: #{tpu_custom_call.1} parent=1 // pred_region
      _
    $region13: #{tpu_custom_call.1} parent=1 // pred_fallthru
      _
    // Predicated region
    $region14: #{tpu_custom_call.1} parent=1 // pred_check
      _
    $region15: #{tpu_custom_call.1} parent=1 // pred_check_branch
      %17 = sbr.rel (0) target = $region17
    $region16: #{tpu_custom_call.1} parent=1 // pred_region
      _
    $region17: #{tpu_custom_call.1} parent=1 // pred_fallthru
      _
    %v18 = vld [vmem:[%s0] sm:$0xff]
    %v19 = vld [vmem:[%s1] sm:$0xff]
    %v20 = vld [vmem:[%s2] sm:$0xff]
    %v21 = vld [vmem:[%s2 + $0x8] sm:$0xff]
    %vm22 = vcmask 64512
    %v24 = vsel %vm22, %v19, 0
    %26 = vmatpush.msra.mxu0 0.0
    %27 = vmatpush.msra.mxu0 0.0
    %28 = vmatpush.msra.mxu0 0.0
    %29 = vmatpush.msra.mxu0 0.0
    %30 = vmatpush.msra.mxu0 0.0
    %31 = vmatpush.msra.mxu0 0.0
    %32 = vmatpush.msra.mxu0 0.0
    %33 = vmatpush.msra.mxu0 0.0
    %34 = vmatpush.msra.mxu0 0.0
    %35 = vmatpush.msra.mxu0 0.0
    %36 = vmatpush.msra.mxu0 0.0
    %37 = vmatpush.msra.mxu0 0.0
    %38 = vmatpush.msra.mxu0 0.0
    %39 = vmatpush.msra.mxu0 0.0
    %40 = vmatpush.msra.mxu0 0.0
    %41 = vmatpush.msra.mxu0 %v20
    %42 = vmatmul.f32.gmra.mxu0 %v24
    %v43 = vpop.f32.mrf.mxu0
    %v44 = vadd.f32 0.0, %v43
    %45 = vdwg.mxu0
    %46 = vmatpush.msra.mxu0 0.0
    %47 = vmatpush.msra.mxu0 0.0
    %48 = vmatpush.msra.mxu0 0.0
    %49 = vmatpush.msra.mxu0 0.0
    %50 = vmatpush.msra.mxu0 0.0
    %51 = vmatpush.msra.mxu0 0.0
    %52 = vmatpush.msra.mxu0 0.0
    %53 = vmatpush.msra.mxu0 0.0
    %54 = vmatpush.msra.mxu0 0.0
    %55 = vmatpush.msra.mxu0 0.0
    %56 = vmatpush.msra.mxu0 0.0
    %57 = vmatpush.msra.mxu0 0.0
    %58 = vmatpush.msra.mxu0 0.0
    %59 = vmatpush.msra.mxu0 0.0
    %60 = vmatpush.msra.mxu0 0.0
    %61 = vmatpush.msra.mxu0 %v21
    %62 = vmatmul.f32.gmra.mxu0 %v24
    %v63 = vpop.f32.mrf.mxu0
    %v64 = vadd.f32 0.0, %v63
    %65 = vdwg.mxu0
    %67 = vrot.lane.b32.xlu0 %v18, 32
    %v68 = vpop.permute.xlu0 %67
    %70 = vrot.lane.b32.xlu0 %v18, 64
    %v71 = vpop.permute.xlu0 %70
    %73 = vrot.lane.b32.xlu0 %v18, 96
    %v74 = vpop.permute.xlu0 %73
    %vm76 = vcmask 261120
    %v77 = vsel %vm76, %v18, %v68
    %vm78 = vcmask 523264
    %v79 = vsel %vm78, %v77, %v71
    %vm80 = vcmask 785408
    %v81 = vsel %vm80, %v79, %v74
    %v82 = vmul.f32 %v44, %v81
    %v83 = vmul.f32 %v64, %v81
    %v84 = vld [vmem:[%s3] sm:$0xff]
    %v85 = vld [vmem:[%s3 + $0x8] sm:$0xff]
    %v86 = vld [vmem:[%s3 + $0x10] sm:$0xff]
    %v87 = vld [vmem:[%s3 + $0x18] sm:$0xff]
    %v88 = vld [vmem:[%s3 + $0x20] sm:$0xff]
    %v89 = vld [vmem:[%s3 + $0x28] sm:$0xff]
    %v90 = vld [vmem:[%s3 + $0x30] sm:$0xff]
    %v91 = vld [vmem:[%s3 + $0x38] sm:$0xff]
    %v92 = vld [vmem:[%s3 + $0x40] sm:$0xff]
    %v93 = vld [vmem:[%s3 + $0x48] sm:$0xff]
    %v94 = vld [vmem:[%s3 + $0x50] sm:$0xff]
    %v95 = vld [vmem:[%s3 + $0x58] sm:$0xff]
    %v96 = vld [vmem:[%s3 + $0x60] sm:$0xff]
    %v97 = vld [vmem:[%s3 + $0x68] sm:$0xff]
    %v98 = vld [vmem:[%s3 + $0x70] sm:$0xff]
    %v99 = vld [vmem:[%s3 + $0x78] sm:$0xff]
    %v100 = vld [vmem:[%s3 + $0x80] sm:$0xff]
    %v101 = vld [vmem:[%s3 + $0x88] sm:$0xff]
    %v102 = vld [vmem:[%s3 + $0x90] sm:$0xff]
    %v103 = vld [vmem:[%s3 + $0x98] sm:$0xff]
    %v104 = vld [vmem:[%s3 + $0xa0] sm:$0xff]
    %v105 = vld [vmem:[%s3 + $0xa8] sm:$0xff]
    %v106 = vld [vmem:[%s3 + $0xb0] sm:$0xff]
    %v107 = vld [vmem:[%s3 + $0xb8] sm:$0xff]
    %v108 = vld [vmem:[%s3 + $0xc0] sm:$0xff]
    %v109 = vld [vmem:[%s3 + $0xc8] sm:$0xff]
    %v110 = vld [vmem:[%s3 + $0xd0] sm:$0xff]
    %v111 = vld [vmem:[%s3 + $0xd8] sm:$0xff]
    %v112 = vld [vmem:[%s3 + $0xe0] sm:$0xff]
    %v113 = vld [vmem:[%s3 + $0xe8] sm:$0xff]
    %v114 = vld [vmem:[%s3 + $0xf0] sm:$0xff]
    %v115 = vld [vmem:[%s3 + $0xf8] sm:$0xff]
    %116 = vmatpush.msra.mxu0 %v99
    %117 = vmatpush.msra.mxu0 %v98
    %118 = vmatpush.msra.mxu0 %v97
    %119 = vmatpush.msra.mxu0 %v96
    %120 = vmatpush.msra.mxu0 %v95
    %121 = vmatpush.msra.mxu0 %v94
    %122 = vmatpush.msra.mxu0 %v93
    %123 = vmatpush.msra.mxu0 %v92
    %124 = vmatpush.msra.mxu0 %v91
    %125 = vmatpush.msra.mxu0 %v90
    %126 = vmatpush.msra.mxu0 %v89
    %127 = vmatpush.msra.mxu0 %v88
    %128 = vmatpush.msra.mxu0 %v87
    %129 = vmatpush.msra.mxu0 %v86
    %130 = vmatpush.msra.mxu0 %v85
    %131 = vmatpush.msra.mxu0 %v84
    %132 = vmatmul.f32.gmra.mxu0 %v82
    %v133 = vpop.f32.mrf.mxu0
    %v134 = vadd.f32 0.0, %v133
    %135 = vdwg.mxu0
    %136 = vmatpush.msra.mxu0 %v115
    %137 = vmatpush.msra.mxu0 %v114
    %138 = vmatpush.msra.mxu0 %v113
    %139 = vmatpush.msra.mxu0 %v112
    %140 = vmatpush.msra.mxu0 %v111
    %141 = vmatpush.msra.mxu0 %v110
    %142 = vmatpush.msra.mxu0 %v109
    %143 = vmatpush.msra.mxu0 %v108
    %144 = vmatpush.msra.mxu0 %v107
    %145 = vmatpush.msra.mxu0 %v106
    %146 = vmatpush.msra.mxu0 %v105
    %147 = vmatpush.msra.mxu0 %v104
    %148 = vmatpush.msra.mxu0 %v103
    %149 = vmatpush.msra.mxu0 %v102
    %150 = vmatpush.msra.mxu0 %v101
    %151 = vmatpush.msra.mxu0 %v100
    %152 = vmatmul.f32.gmra.mxu0 %v83
    %v153 = vpop.f32.mrf.mxu0
    %v154 = vadd.f32 %v134, %v153
    %155 = vdwg.mxu0
    %156 = vst.msk [vmem:[#allocation2] sm:$0xff] %vm76, %v154
    // Predicated region
    $region18: #{tpu_custom_call.1} parent=1 // pred_check
      _
    $region19: #{tpu_custom_call.1} parent=1 // pred_check_branch
      %158 = sbr.rel (0) target = $region21
    $region20: #{tpu_custom_call.1} parent=1 // pred_region
      %160 = vsyncadd [#allocation3], 0
      %s162 = sshll.u32 [#allocation2], 4
      %s163 = int_to_ptr.vmem [resolvable:$true] %s162
      %s164 = sshll.u32 %s4, 4
      %s165 = int_to_ptr.hbm [resolvable:$true] %s164
      %167 = dma.vmem_to_hbm [thread:$0]  %s163, 128, %s165, [#allocation3]
    $region21: #{tpu_custom_call.1} parent=1 // pred_fallthru
      _
    // Predicated region
    $region22: #{tpu_custom_call.1} parent=1 // pred_check
      _
    $region23: #{tpu_custom_call.1} parent=1 // pred_check_branch
      %169 = sbr.rel (0) target = $region25
    $region24: #{tpu_custom_call.1} parent=1 // pred_region
      %171 = dma.done [#allocation3], 128
    $region25: #{tpu_custom_call.1} parent=1 // pred_fallthru
      _
    %172 = vsyncpa [#allocation3], 1

</llo_original>
